<compile_context>
chip_gen: v7x
topology: tpu7x:2x2x1
jax: 0.10.0
libtpu: 0.0.40
codegen_flags: <defaults>
</compile_context>

<pallas_src>
import jax
import jax.numpy as jnp
from jax.experimental import pallas as pl
from jax.experimental.pallas import tpu as pltpu


BN_EPS = 1e-5
D_IN = 256           # input features
D_H1 = 128           # first hidden width
D_H2_PAD = 128       # 56 padded to lane-dense 128 (padded cols are exactly 0)
D_OUT_PAD = 8        # 2 real output cols padded to 8 stored cols (32 B/row)
MAX_TILE_B = 4096    # per step: 4 MiB f32 x tile (double-buffered -> 8 MiB) +
                     # ~6-8 MiB f32/bf16 intermediates ≈ 16-18 MiB VMEM.
                     # Fits v5e/v6e (128 MiB phys) and v7x (64 MiB phys) with
                     # the explicit scoped limit below.
VMEM_LIMIT_BYTES = 48 * 1024 * 1024


def _round_up(n, m):
    return ((n + m - 1) // m) * m


def decoder_kernel(x_ref, w1_ref, b1_ref, w2_ref, b2_ref, w3_ref, b3_ref, o_ref):
    # x tile arrives as f32 (no wrapper cast/pad pass over HBM); the bf16 cast
    # here is free VPU filler under the HBM-bound roofline.
    x = x_ref[...].astype(jnp.bfloat16)                               # (TILE_B, 256)

    # Linear(256, 128) + ReLU  (MXU bf16 matmul, f32 accumulate; VPU math in f32)
    h1 = jnp.dot(x, w1_ref[...], preferred_element_type=jnp.float32) + b1_ref[...]
    h1 = jnp.maximum(h1, 0.0)                                         # (TILE_B, 128) f32

    # Linear(128, 56 -> 128 padded) + ReLU  (padded cols stay exactly 0)
    h2 = jnp.dot(h1.astype(jnp.bfloat16), w2_ref[...],
                 preferred_element_type=jnp.float32) + b2_ref[...]
    h2 = jnp.maximum(h2, 0.0)                                         # (TILE_B, 128) f32

    # Linear(56, 2 -> 8 padded): only 8 output columns are computed & stored.
    h3 = jnp.dot(h2.astype(jnp.bfloat16), w3_ref[...],
                 preferred_element_type=jnp.float32) + b3_ref[...]    # (TILE_B, 8) f32

    o_ref[...] = h3  # BatchNorm (full-batch stats) + final ReLU happen in the wrapper


def _resident_spec(shape):
    # Whole array in VMEM, same block index every grid step -> stays resident.
    return pl.BlockSpec(shape, lambda i: (0,) * len(shape))


@jax.jit
def decoder_forward(x, params):
    """x: (B, 256) float32. Returns (B, 2) float32 (same semantics as Decoder.forward)."""
    B = x.shape[0]
    # >= 2 grid steps for mid/large batches (so both v7x TensorCores get work),
    # exact-fit tile for tiny batches, capped by the VMEM-derived MAX_TILE_B.
    tile_b = min(MAX_TILE_B, _round_up(pl.cdiv(B, 2), 16), _round_up(B, 8))
    grid = (pl.cdiv(B, tile_b),)   # ragged last tile: OOB reads are row-local,
                                   # OOB output rows are masked on store.

    w1, b1 = params["w1"], params["b1"]
    w2, b2 = params["w2"], params["b2"]
    w3, b3 = params["w3"], params["b3"]

    weight_bytes = sum(int(a.size) * a.dtype.itemsize for a in (w1, b1, w2, b2, w3, b3))
    cost = pl.CostEstimate(
        flops=2 * B * (D_IN * D_H1 + D_H1 * D_H2_PAD + D_H2_PAD * D_OUT_PAD),
        transcendentals=0,
        bytes_accessed=B * D_IN * 4 + weight_bytes + B * D_OUT_PAD * 4,
    )

    h3 = pl.pallas_call(
        decoder_kernel,
        out_shape=jax.ShapeDtypeStruct((B, D_OUT_PAD), jnp.float32),
        grid=grid,
        in_specs=[
            pl.BlockSpec((tile_b, D_IN), lambda i: (i, 0)),   # x: tiled over batch
            _resident_spec(w1.shape), _resident_spec(b1.shape),
            _resident_spec(w2.shape), _resident_spec(b2.shape),
            _resident_spec(w3.shape), _resident_spec(b3.shape),
        ],
        out_specs=pl.BlockSpec((tile_b, D_OUT_PAD), lambda i: (i, 0)),
        compiler_params=pltpu.CompilerParams(
            # TODO(synk): on v7x, pltpu.CORE_PARALLEL on this axis shards the
            # batch grid across both TensorCores; PARALLEL kept for portability.
            dimension_semantics=(pltpu.PARALLEL,),
            vmem_limit_bytes=VMEM_LIMIT_BYTES,
        ),
        cost_estimate=cost,
    )(x, w1, b1, w2, b2, w3, b3)

    # Drop the 6 zero padding columns, then full-batch BatchNorm1d(2)
    # (training-mode batch statistics, biased variance, eps=1e-5) + ReLU.
    h3 = h3[:, :2]
    mean = jnp.mean(h3, axis=0, keepdims=True)
    var = jnp.mean((h3 - mean) * (h3 - mean), axis=0, keepdims=True)
    y = (h3 - mean) * jax.lax.rsqrt(var + BN_EPS) * params["gamma"] + params["beta"]
    # TODO(synk): nn.BatchNorm1d running_mean/running_var buffer updates are not emitted.
    return jnp.maximum(y, 0.0)


def init_params(key):
    """PyTorch-style uniform(-1/sqrt(fan_in), 1/sqrt(fan_in)) init.

    Linear weights are stored transposed (in, out), zero-padded (56->128 hidden,
    2->8 output), and cast to bf16 for the MXU. Biases / BN params stay f32.
    """
    dims = [(256, 128), (128, 56), (56, 2)]
    pads = [(D_IN, D_H1), (D_H1, D_H2_PAD), (D_H2_PAD, D_OUT_PAD)]
    keys = jax.random.split(key, 2 * len(dims))
    params = {}
    for i, ((fi, fo), (pi, po)) in enumerate(zip(dims, pads)):
        bound = 1.0 / float(fi) ** 0.5
        w = jax.random.uniform(keys[2 * i], (fi, fo),
                               minval=-bound, maxval=bound, dtype=jnp.float32)
        b = jax.random.uniform(keys[2 * i + 1], (1, fo),
                               minval=-bound, maxval=bound, dtype=jnp.float32)
        w_p = jnp.zeros((pi, po), jnp.float32).at[:fi, :fo].set(w)
        b_p = jnp.zeros((1, po), jnp.float32).at[:, :fo].set(b)
        params[f"w{i + 1}"] = w_p.astype(jnp.bfloat16)
        params[f"b{i + 1}"] = b_p
    # BatchNorm1d(2) affine params: gamma=1, beta=0 (PyTorch default init)
    params["gamma"] = jnp.ones((1, 2), dtype=jnp.float32)
    params["beta"] = jnp.zeros((1, 2), dtype=jnp.float32)
    return params


def decoder_reference(x, params):
    """Pure-JAX reference using the same bf16 matmul-operand quantization."""
    xb = x.astype(jnp.bfloat16)
    h1 = jnp.maximum(
        jnp.dot(xb, params["w1"], preferred_element_type=jnp.float32) + params["b1"], 0.0)
    h2 = jnp.maximum(
        jnp.dot(h1.astype(jnp.bfloat16), params["w2"],
                preferred_element_type=jnp.float32) + params["b2"], 0.0)
    h3 = jnp.dot(h2.astype(jnp.bfloat16), params["w3"],
                 preferred_element_type=jnp.float32) + params["b3"]
    h3 = h3[:, :2]
    mean = jnp.mean(h3, axis=0, keepdims=True)
    var = jnp.mean((h3 - mean) ** 2, axis=0, keepdims=True)
    y = (h3 - mean) * jax.lax.rsqrt(var + BN_EPS) * params["gamma"] + params["beta"]
    return jnp.maximum(y, 0.0)


if __name__ == "__main__":
    key = jax.random.PRNGKey(0)
    k_param, k_x = jax.random.split(key)

    B = 8  # BatchNorm1d needs batch > 1 in training mode
    params = init_params(k_param)
    x = jax.random.normal(k_x, (B, D_IN), dtype=jnp.float32)

    out = decoder_forward(x, params)
    out = jax.block_until_ready(out)

    ref = decoder_reference(x, params)
    assert out.shape == (B, 2), out.shape
    assert jnp.allclose(out, ref, atol=1e-3, rtol=1e-3), (
        f"max abs err = {jnp.max(jnp.abs(out - ref))}"
    )
    print("KERNEL_OK")
</pallas_src>

<mosaic_0001>
module attributes {stable_mosaic.version = 11 : i64} {
  func.func @decoder_kernel(%arg0: i32, %arg1: memref<8x256xf32, #tpu.memory_space<vmem>>, %arg2: memref<256x128xbf16, #tpu.memory_space<vmem>>, %arg3: memref<1x128xf32, #tpu.memory_space<vmem>>, %arg4: memref<128x128xbf16, #tpu.memory_space<vmem>>, %arg5: memref<1x128xf32, #tpu.memory_space<vmem>>, %arg6: memref<128x8xbf16, #tpu.memory_space<vmem>>, %arg7: memref<1x8xf32, #tpu.memory_space<vmem>>, %arg8: memref<8x8xf32, #tpu.memory_space<vmem>>) attributes {dimension_semantics = [#tpu.dimension_semantics<parallel>], iteration_bounds = array<i64: 1>, scalar_prefetch = 0 : i64, scratch_operands = 0 : i64, tpu.core_type = #tpu.core_type<tc>, window_params = [{transform_indices = @transform_0, window_bounds = array<i64: 8, 256>}, {pipeline_mode = #tpu.pipeline_mode<synchronous>, transform_indices = @transform_1, window_bounds = array<i64: 256, 128>}, {pipeline_mode = #tpu.pipeline_mode<synchronous>, transform_indices = @transform_2, window_bounds = array<i64: 1, 128>}, {pipeline_mode = #tpu.pipeline_mode<synchronous>, transform_indices = @transform_3, window_bounds = array<i64: 128, 128>}, {pipeline_mode = #tpu.pipeline_mode<synchronous>, transform_indices = @transform_4, window_bounds = array<i64: 1, 128>}, {pipeline_mode = #tpu.pipeline_mode<synchronous>, transform_indices = @transform_5, window_bounds = array<i64: 128, 8>}, {pipeline_mode = #tpu.pipeline_mode<synchronous>, transform_indices = @transform_6, window_bounds = array<i64: 1, 8>}, {transform_indices = @transform_7, window_bounds = array<i64: 8, 8>}]} {
    %c0 = arith.constant 0 : index
    %c0_0 = arith.constant 0 : index
    %0 = vector.load %arg1[%c0, %c0_0] : memref<8x256xf32, #tpu.memory_space<vmem>>, vector<8x256xf32>
    %1 = arith.truncf %0 : vector<8x256xf32> to vector<8x256xbf16>
    %c0_1 = arith.constant 0 : index
    %c0_2 = arith.constant 0 : index
    %2 = vector.load %arg2[%c0_1, %c0_2] : memref<256x128xbf16, #tpu.memory_space<vmem>>, vector<256x128xbf16>
    %cst = arith.constant dense<0.000000e+00> : vector<8x128xf32>
    %3 = tpu.matmul %1, %2, %cst {dimension_numbers = #tpu.dot_dimension_numbers<[1], [0], [0], [1], [0, 0, 1, 1], [], []>} : vector<8x256xbf16>, vector<256x128xbf16>, vector<8x128xf32> -> vector<8x128xf32>
    %c0_3 = arith.constant 0 : index
    %c0_4 = arith.constant 0 : index
    %4 = vector.load %arg3[%c0_3, %c0_4] : memref<1x128xf32, #tpu.memory_space<vmem>>, vector<1x128xf32>
    %5 = vector.broadcast %4 : vector<1x128xf32> to vector<8x128xf32>
    %6 = arith.addf %3, %5 : vector<8x128xf32>
    %cst_5 = arith.constant 0.000000e+00 : f32
    %7 = vector.broadcast %cst_5 : f32 to vector<8x128xf32>
    %8 = arith.maximumf %6, %7 : vector<8x128xf32>
    %9 = arith.truncf %8 : vector<8x128xf32> to vector<8x128xbf16>
    %c0_6 = arith.constant 0 : index
    %c0_7 = arith.constant 0 : index
    %10 = vector.load %arg4[%c0_6, %c0_7] : memref<128x128xbf16, #tpu.memory_space<vmem>>, vector<128x128xbf16>
    %cst_8 = arith.constant dense<0.000000e+00> : vector<8x128xf32>
    %11 = tpu.matmul %9, %10, %cst_8 {dimension_numbers = #tpu.dot_dimension_numbers<[1], [0], [0], [1], [0, 0, 1, 1], [], []>} : vector<8x128xbf16>, vector<128x128xbf16>, vector<8x128xf32> -> vector<8x128xf32>
    %c0_9 = arith.constant 0 : index
    %c0_10 = arith.constant 0 : index
    %12 = vector.load %arg5[%c0_9, %c0_10] : memref<1x128xf32, #tpu.memory_space<vmem>>, vector<1x128xf32>
    %13 = vector.broadcast %12 : vector<1x128xf32> to vector<8x128xf32>
    %14 = arith.addf %11, %13 : vector<8x128xf32>
    %cst_11 = arith.constant 0.000000e+00 : f32
    %15 = vector.broadcast %cst_11 : f32 to vector<8x128xf32>
    %16 = arith.maximumf %14, %15 : vector<8x128xf32>
    %17 = arith.truncf %16 : vector<8x128xf32> to vector<8x128xbf16>
    %c0_12 = arith.constant 0 : index
    %c0_13 = arith.constant 0 : index
    %18 = vector.load %arg6[%c0_12, %c0_13] : memref<128x8xbf16, #tpu.memory_space<vmem>>, vector<128x8xbf16>
    %cst_14 = arith.constant dense<0.000000e+00> : vector<8x8xf32>
    %19 = tpu.matmul %17, %18, %cst_14 {dimension_numbers = #tpu.dot_dimension_numbers<[1], [0], [0], [1], [0, 0, 1, 1], [], []>} : vector<8x128xbf16>, vector<128x8xbf16>, vector<8x8xf32> -> vector<8x8xf32>
    %c0_15 = arith.constant 0 : index
    %c0_16 = arith.constant 0 : index
    %20 = vector.load %arg7[%c0_15, %c0_16] : memref<1x8xf32, #tpu.memory_space<vmem>>, vector<1x8xf32>
    %21 = vector.broadcast %20 : vector<1x8xf32> to vector<8x8xf32>
    %22 = arith.addf %19, %21 : vector<8x8xf32>
    %c0_17 = arith.constant 0 : index
    %c0_18 = arith.constant 0 : index
    %23 = vector.load %arg8[%c0_17, %c0_18] : memref<8x8xf32, #tpu.memory_space<vmem>>, vector<8x8xf32>
    tpu.vector_store %arg8[%c0_17, %c0_18], %22 {strides = array<i32>} : memref<8x8xf32, #tpu.memory_space<vmem>>, vector<8x8xf32>,
    return
  }
  func.func @transform_0(%arg0: i32) -> (i32, i32) {
    %c0_i32 = arith.constant 0 : i32
    %c0_i32_0 = arith.constant 0 : i32
    return %arg0, %c0_i32 : i32, i32
  }
  func.func @transform_1(%arg0: i32) -> (i32, i32) {
    %c0_i32 = arith.constant 0 : i32
    %c0_i32_0 = arith.constant 0 : i32
    %c0_i32_1 = arith.constant 0 : i32
    return %c0_i32, %c0_i32_0 : i32, i32
  }
  func.func @transform_2(%arg0: i32) -> (i32, i32) {
    %c0_i32 = arith.constant 0 : i32
    %c0_i32_0 = arith.constant 0 : i32
    %c0_i32_1 = arith.constant 0 : i32
    return %c0_i32, %c0_i32_0 : i32, i32
  }
  func.func @transform_3(%arg0: i32) -> (i32, i32) {
    %c0_i32 = arith.constant 0 : i32
    %c0_i32_0 = arith.constant 0 : i32
    %c0_i32_1 = arith.constant 0 : i32
    return %c0_i32, %c0_i32_0 : i32, i32
  }
  func.func @transform_4(%arg0: i32) -> (i32, i32) {
    %c0_i32 = arith.constant 0 : i32
    %c0_i32_0 = arith.constant 0 : i32
    %c0_i32_1 = arith.constant 0 : i32
    return %c0_i32, %c0_i32_0 : i32, i32
  }
  func.func @transform_5(%arg0: i32) -> (i32, i32) {
    %c0_i32 = arith.constant 0 : i32
    %c0_i32_0 = arith.constant 0 : i32
    %c0_i32_1 = arith.constant 0 : i32
    return %c0_i32, %c0_i32_0 : i32, i32
  }
  func.func @transform_6(%arg0: i32) -> (i32, i32) {
    %c0_i32 = arith.constant 0 : i32
    %c0_i32_0 = arith.constant 0 : i32
    %c0_i32_1 = arith.constant 0 : i32
    return %c0_i32, %c0_i32_0 : i32, i32
  }
  func.func @transform_7(%arg0: i32) -> (i32, i32) {
    %c0_i32 = arith.constant 0 : i32
    %c0_i32_0 = arith.constant 0 : i32
    return %arg0, %c0_i32 : i32, i32
  }
}

</mosaic_0001>

<llo_original>
// kernel: decoder_forward.1
$region0: #{decoder_forward.1}
  #allocation0 [shape = 'u32[]', space=smem, size = 0x4, offset = 0x4, fixed_abs, tag = 'smem constant byte address 0x4 - core index']
  #allocation1 [shape = 'u32[144,128]{1,0:T(1,128)}', space=vmem, size = 0x12000, scoped, tag = 'internal scratch']
  %s0 = inlined_call_operand.vmem [shape: f32[8,256], index: 0, kind: input, shape index: {}]
  %s1 = inlined_call_operand.hbm [shape: bf16[256,128], index: 1, kind: input, shape index: {}]
  %s2 = inlined_call_operand.vmem [shape: f32[1,128], index: 2, kind: input, shape index: {}]
  %s3 = inlined_call_operand.vmem [shape: bf16[128,128], index: 3, kind: input, shape index: {}]
  %s4 = inlined_call_operand.vmem [shape: f32[1,128], index: 4, kind: input, shape index: {}]
  %s5 = inlined_call_operand.vmem [shape: bf16[128,8], index: 5, kind: input, shape index: {}]
  %s6 = inlined_call_operand.vmem [shape: f32[1,8], index: 6, kind: input, shape index: {}]
  %s7 = inlined_call_operand.vmem [shape: f32[8,8], index: 7, kind: output, shape index: {}]
  %s8 = sld [smem:[#allocation0]]
  $region42: #{decoder_forward.1} parent=0
    _
  %s10 = ssub.s32 1, %s8
  %s11 = scalar_select 0, %s10, %s8
  $region1: #{decoder_forward.1} parent=0
    #allocation2 [shape = 'u8[65536]{0}', space=vmem, size = 0x10000, scoped, tag = 'input window, operand 1, single buffered']
    #allocation3 [shape = 's32[1]{0}', space=sflag, size = 0x4, scoped, tag = 'scoped memory for decoder_forward.1']
    %12 = vsyncpa [#allocation3], 0
    // Predicated region
    $region2: #{decoder_forward.1} parent=1 // pred_check
      _
    $region3: #{decoder_forward.1} parent=1 // pred_check_branch
      %14 = sbr.rel (0) target = $region5
    $region4: #{decoder_forward.1} parent=1 // pred_region
      _
    $region5: #{decoder_forward.1} parent=1 // pred_fallthru
      _
    // Predicated region
    $region6: #{decoder_forward.1} parent=1 // pred_check
      _
    $region7: #{decoder_forward.1} parent=1 // pred_check_branch
      %16 = sbr.rel (0) target = $region9
    $region8: #{decoder_forward.1} parent=1 // pred_region
      %s18 = ssub.s32 2048, 2048
      %19 = vsyncadd [#allocation3], %s18
      %s20 = sshll.u32 [#allocation2], 4
      %s21 = int_to_ptr.vmem [resolvable:$true] %s20
      %26 = dma.hbm_to_vmem [thread:$0]  %s1, 2048, %s21, [#allocation3], 64, 64, 4
    $region9: #{decoder_forward.1} parent=1 // pred_fallthru
      _
    // Predicated region
    $region10: #{decoder_forward.1} parent=1 // pred_check
      _
    $region11: #{decoder_forward.1} parent=1 // pred_check_branch
      %28 = sbr.rel (0) target = $region13
    $region12: #{decoder_forward.1} parent=1 // pred_region
      _
    $region13: #{decoder_forward.1} parent=1 // pred_fallthru
      _
    // Predicated region
    $region14: #{decoder_forward.1} parent=1 // pred_check
      _
    $region15: #{decoder_forward.1} parent=1 // pred_check_branch
      %30 = sbr.rel (0) target = $region17
    $region16: #{decoder_forward.1} parent=1 // pred_region
      _
    $region17: #{decoder_forward.1} parent=1 // pred_fallthru
      _
    // Predicated region
    $region18: #{decoder_forward.1} parent=1 // pred_check
      _
    $region19: #{decoder_forward.1} parent=1 // pred_check_branch
      %32 = sbr.rel (0) target = $region21
    $region20: #{decoder_forward.1} parent=1 // pred_region
      _
    $region21: #{decoder_forward.1} parent=1 // pred_fallthru
      _
    // Predicated region
    $region22: #{decoder_forward.1} parent=1 // pred_check
      _
    $region23: #{decoder_forward.1} parent=1 // pred_check_branch
      %34 = sbr.rel (0) target = $region25
    $region24: #{decoder_forward.1} parent=1 // pred_region
      _
    $region25: #{decoder_forward.1} parent=1 // pred_fallthru
      _
    // Predicated region
    $region26: #{decoder_forward.1} parent=1 // pred_check
      _
    $region27: #{decoder_forward.1} parent=1 // pred_check_branch
      %36 = sbr.rel (0) target = $region29
    $region28: #{decoder_forward.1} parent=1 // pred_region
      _
    $region29: #{decoder_forward.1} parent=1 // pred_fallthru
      _
    // Predicated region
    $region30: #{decoder_forward.1} parent=1 // pred_check
      _
    $region31: #{decoder_forward.1} parent=1 // pred_check_branch
      %38 = sbr.rel (0) target = $region33
    $region32: #{decoder_forward.1} parent=1 // pred_region
      %39 = dma.done [#allocation3], 2048
    $region33: #{decoder_forward.1} parent=1 // pred_fallthru
      _
    %v41 = vld [vmem:[%s0] sm:$0xff]
    %v42 = vld [vmem:[%s0 + $0x8] sm:$0xff]
    %v43 = vpack.c.bf16 %v41, %v41
    %v44 = vpack.c.bf16 %v42, %v42
    %v45 = vld [vmem:[#allocation2] sm:$0xf]
    %v46 = vld [vmem:[#allocation2 + $0x4] sm:$0xf]
    %v47 = vld [vmem:[#allocation2 + $0x8] sm:$0xf]
    %v48 = vld [vmem:[#allocation2 + $0xc] sm:$0xf]
    %v49 = vld [vmem:[#allocation2 + $0x10] sm:$0xf]
    %v50 = vld [vmem:[#allocation2 + $0x14] sm:$0xf]
    %v51 = vld [vmem:[#allocation2 + $0x18] sm:$0xf]
    %v52 = vld [vmem:[#allocation2 + $0x1c] sm:$0xf]
    %v53 = vld [vmem:[#allocation2 + $0x20] sm:$0xf]
    %v54 = vld [vmem:[#allocation2 + $0x24] sm:$0xf]
    %v55 = vld [vmem:[#allocation2 + $0x28] sm:$0xf]
    %v56 = vld [vmem:[#allocation2 + $0x2c] sm:$0xf]
    %v57 = vld [vmem:[#allocation2 + $0x30] sm:$0xf]
    %v58 = vld [vmem:[#allocation2 + $0x34] sm:$0xf]
    %v59 = vld [vmem:[#allocation2 + $0x38] sm:$0xf]
    %v60 = vld [vmem:[#allocation2 + $0x3c] sm:$0xf]
    %v61 = vld [vmem:[#allocation2 + $0x40] sm:$0xf]
    %v62 = vld [vmem:[#allocation2 + $0x44] sm:$0xf]
    %v63 = vld [vmem:[#allocation2 + $0x48] sm:$0xf]
    %v64 = vld [vmem:[#allocation2 + $0x4c] sm:$0xf]
    %v65 = vld [vmem:[#allocation2 + $0x50] sm:$0xf]
    %v66 = vld [vmem:[#allocation2 + $0x54] sm:$0xf]
    %v67 = vld [vmem:[#allocation2 + $0x58] sm:$0xf]
    %v68 = vld [vmem:[#allocation2 + $0x5c] sm:$0xf]
    %v69 = vld [vmem:[#allocation2 + $0x60] sm:$0xf]
    %v70 = vld [vmem:[#allocation2 + $0x64] sm:$0xf]
    %v71 = vld [vmem:[#allocation2 + $0x68] sm:$0xf]
    %v72 = vld [vmem:[#allocation2 + $0x6c] sm:$0xf]
    %v73 = vld [vmem:[#allocation2 + $0x70] sm:$0xf]
    %v74 = vld [vmem:[#allocation2 + $0x74] sm:$0xf]
    %v75 = vld [vmem:[#allocation2 + $0x78] sm:$0xf]
    %v76 = vld [vmem:[#allocation2 + $0x7c] sm:$0xf]
    %v77 = vld [vmem:[%s2] sm:$0x1]
    %v79 = vlaneseq
    %v80 = vshrl.u32 %v79, 7
    %v81 = vsub.s32 0, %v80
    %v82 = vrot.slane %v77, %v81
    %v116 = vunpack.c.l.b16 %v45
    %v117 = vunpack.c.l.b16 %v46
    %v118 = vunpack.c.l.b16 %v47
    %v119 = vunpack.c.l.b16 %v48
    %v120 = vunpack.c.l.b16 %v49
    %v121 = vunpack.c.l.b16 %v50
    %v122 = vunpack.c.l.b16 %v51
    %v123 = vunpack.c.l.b16 %v52
    %v124 = vunpack.c.l.b16 %v53
    %v125 = vunpack.c.l.b16 %v54
    %v126 = vunpack.c.l.b16 %v55
    %v127 = vunpack.c.l.b16 %v56
    %v128 = vunpack.c.l.b16 %v57
    %v129 = vunpack.c.l.b16 %v58
    %v130 = vunpack.c.l.b16 %v59
    %v131 = vunpack.c.l.b16 %v60
    %v132 = vunpack.c.l.b16 %v61
    %v133 = vunpack.c.l.b16 %v62
    %v134 = vunpack.c.l.b16 %v63
    %v135 = vunpack.c.l.b16 %v64
    %v136 = vunpack.c.l.b16 %v65
    %v137 = vunpack.c.l.b16 %v66
    %v138 = vunpack.c.l.b16 %v67
    %v139 = vunpack.c.l.b16 %v68
    %v140 = vunpack.c.l.b16 %v69
    %v141 = vunpack.c.l.b16 %v70
    %v142 = vunpack.c.l.b16 %v71
    %v143 = vunpack.c.l.b16 %v72
    %v144 = vunpack.c.l.b16 %v73
    %v145 = vunpack.c.l.b16 %v74
    %v146 = vunpack.c.l.b16 %v75
    %v147 = vunpack.c.l.b16 %v76
    %v148 = vpack.c.b16 %v117, %v116
    %v149 = vpack.c.b16 %v119, %v118
    %v150 = vpack.c.b16 %v121, %v120
    %v151 = vpack.c.b16 %v123, %v122
    %v152 = vpack.c.b16 %v125, %v124
    %v153 = vpack.c.b16 %v127, %v126
    %v154 = vpack.c.b16 %v129, %v128
    %v155 = vpack.c.b16 %v131, %v130
    %v156 = vpack.c.b16 %v133, %v132
    %v157 = vpack.c.b16 %v135, %v134
    %v158 = vpack.c.b16 %v137, %v136
    %v159 = vpack.c.b16 %v139, %v138
    %v160 = vpack.c.b16 %v141, %v140
    %v161 = vpack.c.b16 %v143, %v142
    %v162 = vpack.c.b16 %v145, %v144
    %v163 = vpack.c.b16 %v147, %v146
    %180 = vmatprep.subr.bf16.mxu0 0
    %181 = vmatpush1.bf16.msra.mxu0 %v148
    %182 = vmatprep.subr.bf16.mxu0 0
    %183 = vmatpush1.bf16.msra.mxu0 %v149
    %184 = vmatprep.subr.bf16.mxu0 0
    %185 = vmatpush1.bf16.msra.mxu0 %v150
    %186 = vmatprep.subr.bf16.mxu0 0
    %187 = vmatpush1.bf16.msra.mxu0 %v151
    %188 = vmatprep.subr.bf16.mxu0 0
    %189 = vmatpush1.bf16.msra.mxu0 %v152
    %190 = vmatprep.subr.bf16.mxu0 0
    %191 = vmatpush1.bf16.msra.mxu0 %v153
    %192 = vmatprep.subr.bf16.mxu0 0
    %193 = vmatpush1.bf16.msra.mxu0 %v154
    %194 = vmatprep.subr.bf16.mxu0 0
    %195 = vmatpush1.bf16.msra.mxu0 %v155
    %196 = vmatprep.subr.bf16.mxu0 0
    %197 = vmatpush1.bf16.msra.mxu0 %v156
    %198 = vmatprep.subr.bf16.mxu0 0
    %199 = vmatpush1.bf16.msra.mxu0 %v157
    %200 = vmatprep.subr.bf16.mxu0 0
    %201 = vmatpush1.bf16.msra.mxu0 %v158
    %202 = vmatprep.subr.bf16.mxu0 0
    %203 = vmatpush1.bf16.msra.mxu0 %v159
    %204 = vmatprep.subr.bf16.mxu0 0
    %205 = vmatpush1.bf16.msra.mxu0 %v160
    %206 = vmatprep.subr.bf16.mxu0 0
    %207 = vmatpush1.bf16.msra.mxu0 %v161
    %208 = vmatprep.subr.bf16.mxu0 0
    %209 = vmatpush1.bf16.msra.mxu0 %v162
    %210 = vmatprep.subr.bf16.mxu0 0
    %211 = vmatpush1.bf16.msra.mxu0 %v163
    %212 = vmatprep.mubr.bf16.mxu0 %v44
    %213 = vmatmul.mubr.bf16.gmra.mrb[0].mxu0 %v43
    %v214 = vpop.f32.mrb[0].mxu0
    %v215 = vadd.f32 %v82, %v214
    %v216 = vpop.f32.mrb[0].mxu0
    %v217 = vpop.f32.mrb[0].mxu0
    %v218 = vpop.f32.mrb[0].mxu0
    %219 = vdwg.mxu0
    %v220 = vmax.f32 %v215, 0.0
    %v221 = vpack.c.bf16 %v220, %v220
    %v222 = vld [vmem:[%s3] sm:$0xf]
    %v223 = vld [vmem:[%s3 + $0x4] sm:$0xf]
    %v224 = vld [vmem:[%s3 + $0x8] sm:$0xf]
    %v225 = vld [vmem:[%s3 + $0xc] sm:$0xf]
    %v226 = vld [vmem:[%s3 + $0x10] sm:$0xf]
    %v227 = vld [vmem:[%s3 + $0x14] sm:$0xf]
    %v228 = vld [vmem:[%s3 + $0x18] sm:$0xf]
    %v229 = vld [vmem:[%s3 + $0x1c] sm:$0xf]
    %v230 = vld [vmem:[%s3 + $0x20] sm:$0xf]
    %v231 = vld [vmem:[%s3 + $0x24] sm:$0xf]
    %v232 = vld [vmem:[%s3 + $0x28] sm:$0xf]
    %v233 = vld [vmem:[%s3 + $0x2c] sm:$0xf]
    %v234 = vld [vmem:[%s3 + $0x30] sm:$0xf]
    %v235 = vld [vmem:[%s3 + $0x34] sm:$0xf]
    %v236 = vld [vmem:[%s3 + $0x38] sm:$0xf]
    %v237 = vld [vmem:[%s3 + $0x3c] sm:$0xf]
    %v238 = vld [vmem:[%s4] sm:$0x1]
    %v240 = vlaneseq
    %v241 = vshrl.u32 %v240, 7
    %v242 = vsub.s32 0, %v241
    %v243 = vrot.slane %v238, %v242
    %v261 = vunpack.c.l.b16 %v222
    %v262 = vunpack.c.l.b16 %v223
    %v263 = vunpack.c.l.b16 %v224
    %v264 = vunpack.c.l.b16 %v225
    %v265 = vunpack.c.l.b16 %v226
    %v266 = vunpack.c.l.b16 %v227
    %v267 = vunpack.c.l.b16 %v228
    %v268 = vunpack.c.l.b16 %v229
    %v269 = vunpack.c.l.b16 %v230
    %v270 = vunpack.c.l.b16 %v231
    %v271 = vunpack.c.l.b16 %v232
    %v272 = vunpack.c.l.b16 %v233
    %v273 = vunpack.c.l.b16 %v234
    %v274 = vunpack.c.l.b16 %v235
    %v275 = vunpack.c.l.b16 %v236
    %v276 = vunpack.c.l.b16 %v237
    %v277 = vpack.c.b16 %v262, %v261
    %v278 = vpack.c.b16 %v264, %v263
    %v279 = vpack.c.b16 %v266, %v265
    %v280 = vpack.c.b16 %v268, %v267
    %v281 = vpack.c.b16 %v270, %v269
    %v282 = vpack.c.b16 %v272, %v271
    %v283 = vpack.c.b16 %v274, %v273
    %v284 = vpack.c.b16 %v276, %v275
    %293 = vmatprep.subr.bf16.mxu0 0
    %294 = vmatpush1.bf16.msra.mxu0 %v277
    %295 = vmatprep.subr.bf16.mxu0 0
    %296 = vmatpush1.bf16.msra.mxu0 %v278
    %297 = vmatprep.subr.bf16.mxu0 0
    %298 = vmatpush1.bf16.msra.mxu0 %v279
    %299 = vmatprep.subr.bf16.mxu0 0
    %300 = vmatpush1.bf16.msra.mxu0 %v280
    %301 = vmatprep.subr.bf16.mxu0 0
    %302 = vmatpush1.bf16.msra.mxu0 %v281
    %303 = vmatprep.subr.bf16.mxu0 0
    %304 = vmatpush1.bf16.msra.mxu0 %v282
    %305 = vmatprep.subr.bf16.mxu0 0
    %306 = vmatpush1.bf16.msra.mxu0 %v283
    %307 = vmatprep.subr.bf16.mxu0 0
    %308 = vmatpush1.bf16.msra.mxu0 %v284
    %309 = vmatprep.subr.bf16.mxu0 0
    %310 = vmatpush1.bf16.msra.mxu0 0
    %311 = vmatprep.subr.bf16.mxu0 0
    %312 = vmatpush1.bf16.msra.mxu0 0
    %313 = vmatprep.subr.bf16.mxu0 0
    %314 = vmatpush1.bf16.msra.mxu0 0
    %315 = vmatprep.subr.bf16.mxu0 0
    %316 = vmatpush1.bf16.msra.mxu0 0
    %317 = vmatprep.subr.bf16.mxu0 0
    %318 = vmatpush1.bf16.msra.mxu0 0
    %319 = vmatprep.subr.bf16.mxu0 0
    %320 = vmatpush1.bf16.msra.mxu0 0
    %321 = vmatprep.subr.bf16.mxu0 0
    %322 = vmatpush1.bf16.msra.mxu0 0
    %323 = vmatprep.subr.bf16.mxu0 0
    %324 = vmatpush1.bf16.msra.mxu0 0
    %325 = vmatprep.mubr.bf16.mxu0 0
    %326 = vmatmul.mubr.bf16.gmra.mrb[0].mxu0 %v221
    %v327 = vpop.f32.mrb[0].mxu0
    %v328 = vadd.f32 %v243, %v327
    %v329 = vpop.f32.mrb[0].mxu0
    %v330 = vpop.f32.mrb[0].mxu0
    %v331 = vpop.f32.mrb[0].mxu0
    %332 = vdwg.mxu0
    %v333 = vmax.f32 %v328, 0.0
    %v334 = vpack.c.bf16 %v333, %v333
    %v335 = vld [vmem:[%s5] sm:$0xf]
    %v336 = vld [vmem:[%s5 + $0x4] sm:$0xf]
    %v337 = vld [vmem:[%s5 + $0x8] sm:$0xf]
    %v338 = vld [vmem:[%s5 + $0xc] sm:$0xf]
    %v339 = vld [vmem:[%s5 + $0x10] sm:$0xf]
    %v340 = vld [vmem:[%s5 + $0x14] sm:$0xf]
    %v341 = vld [vmem:[%s5 + $0x18] sm:$0xf]
    %v342 = vld [vmem:[%s5 + $0x1c] sm:$0xf]
    %v343 = vld [vmem:[%s5 + $0x20] sm:$0xf]
    %v344 = vld [vmem:[%s5 + $0x24] sm:$0xf]
    %v345 = vld [vmem:[%s5 + $0x28] sm:$0xf]
    %v346 = vld [vmem:[%s5 + $0x2c] sm:$0xf]
    %v347 = vld [vmem:[%s5 + $0x30] sm:$0xf]
    %v348 = vld [vmem:[%s5 + $0x34] sm:$0xf]
    %v349 = vld [vmem:[%s5 + $0x38] sm:$0xf]
    %v350 = vld [vmem:[%s5 + $0x3c] sm:$0xf]
    %v351 = vld [vmem:[%s6] sm:$0x1]
    %v353 = vlaneseq
    %v354 = vshrl.u32 %v353, 7
    %v355 = vsub.s32 0, %v354
    %v356 = vrot.slane %v351, %v355
    %v374 = vunpack.c.l.b16 %v335
    %v375 = vunpack.c.l.b16 %v336
    %v376 = vunpack.c.l.b16 %v337
    %v377 = vunpack.c.l.b16 %v338
    %v378 = vunpack.c.l.b16 %v339
    %v379 = vunpack.c.l.b16 %v340
    %v380 = vunpack.c.l.b16 %v341
    %v381 = vunpack.c.l.b16 %v342
    %v382 = vunpack.c.l.b16 %v343
    %v383 = vunpack.c.l.b16 %v344
    %v384 = vunpack.c.l.b16 %v345
    %v385 = vunpack.c.l.b16 %v346
    %v386 = vunpack.c.l.b16 %v347
    %v387 = vunpack.c.l.b16 %v348
    %v388 = vunpack.c.l.b16 %v349
    %v389 = vunpack.c.l.b16 %v350
    %v390 = vpack.c.b16 %v375, %v374
    %v391 = vpack.c.b16 %v377, %v376
    %v392 = vpack.c.b16 %v379, %v378
    %v393 = vpack.c.b16 %v381, %v380
    %v394 = vpack.c.b16 %v383, %v382
    %v395 = vpack.c.b16 %v385, %v384
    %v396 = vpack.c.b16 %v387, %v386
    %v397 = vpack.c.b16 %v389, %v388
    %406 = vmatprep.subr.bf16.mxu0 0
    %407 = vmatpush1.bf16.msra.mxu0 %v390
    %408 = vmatprep.subr.bf16.mxu0 0
    %409 = vmatpush1.bf16.msra.mxu0 %v391
    %410 = vmatprep.subr.bf16.mxu0 0
    %411 = vmatpush1.bf16.msra.mxu0 %v392
    %412 = vmatprep.subr.bf16.mxu0 0
    %413 = vmatpush1.bf16.msra.mxu0 %v393
    %414 = vmatprep.subr.bf16.mxu0 0
    %415 = vmatpush1.bf16.msra.mxu0 %v394
    %416 = vmatprep.subr.bf16.mxu0 0
    %417 = vmatpush1.bf16.msra.mxu0 %v395
    %418 = vmatprep.subr.bf16.mxu0 0
    %419 = vmatpush1.bf16.msra.mxu0 %v396
    %420 = vmatprep.subr.bf16.mxu0 0
    %421 = vmatpush1.bf16.msra.mxu0 %v397
    %422 = vmatprep.subr.bf16.mxu0 0
    %423 = vmatpush1.bf16.msra.mxu0 0
    %424 = vmatprep.subr.bf16.mxu0 0
    %425 = vmatpush1.bf16.msra.mxu0 0
    %426 = vmatprep.subr.bf16.mxu0 0
    %427 = vmatpush1.bf16.msra.mxu0 0
    %428 = vmatprep.subr.bf16.mxu0 0
    %429 = vmatpush1.bf16.msra.mxu0 0
    %430 = vmatprep.subr.bf16.mxu0 0
    %431 = vmatpush1.bf16.msra.mxu0 0
    %432 = vmatprep.subr.bf16.mxu0 0
    %433 = vmatpush1.bf16.msra.mxu0 0
    %434 = vmatprep.subr.bf16.mxu0 0
    %435 = vmatpush1.bf16.msra.mxu0 0
    %436 = vmatprep.subr.bf16.mxu0 0
    %437 = vmatpush1.bf16.msra.mxu0 0
    %438 = vmatprep.mubr.bf16.mxu0 0
    %439 = vmatmul.mubr.bf16.gmra.mrb[0].mxu0 %v334
    %v440 = vpop.f32.mrb[0].mxu0
    %v441 = vadd.f32 %v356, %v440
    %v442 = vpop.f32.mrb[0].mxu0
    %v443 = vpop.f32.mrb[0].mxu0
    %v444 = vpop.f32.mrb[0].mxu0
    %445 = vdwg.mxu0
    %vm446 = vcmask 64512
    %447 = vst.msk [vmem:[%s7] sm:$0xff] %vm446, %v441
    // Predicated region
    $region34: #{decoder_forward.1} parent=1 // pred_check
      _
    $region35: #{decoder_forward.1} parent=1 // pred_check_branch
      %449 = sbr.rel (0) target = $region37
    $region36: #{decoder_forward.1} parent=1 // pred_region
      _
    $region37: #{decoder_forward.1} parent=1 // pred_fallthru
      _
    // Predicated region
    $region38: #{decoder_forward.1} parent=1 // pred_check
      _
    $region39: #{decoder_forward.1} parent=1 // pred_check_branch
      %451 = sbr.rel (0) target = $region41
    $region40: #{decoder_forward.1} parent=1 // pred_region
      _
    $region41: #{decoder_forward.1} parent=1 // pred_fallthru
      _
    %452 = vsyncpa [#allocation3], 1

</llo_original>
